<compile_context>
chip_gen: v7x
topology: tpu7x:2x2x1
jax: 0.10.0
libtpu: 0.0.40
codegen_flags: <defaults>
</compile_context>

<pallas_src>
import jax
import jax.numpy as jnp
from jax.experimental import pallas as pl
from jax.experimental.pallas import tpu as pltpu


def _upsample_kernel(x_ref, w_ref, shift_ref, o_ref):
    """1x1 conv (+ folded BN) + ReLU6; 2x2 nearest duplication via 4 slab stores.

    x_ref:     (1, Cin, S)         NCHW row-tile, spatial flattened (S = TH*W)
    w_ref:     (Cout, Cin)         conv weight with BN scale folded in
    shift_ref: (Cout, 1)           folded BN shift
    o_ref:     (1, 2, 2, Cout, S)  (dh, dw)-duplicated conv output; the 2x
                                   interleave is deferred to the wrapper.
    """
    x = x_ref[0]                       # (Cin, S)
    w = w_ref[...]                     # (Cout, Cin)
    cin = x.shape[0]

    if cin <= 8:
        # Tiny contraction: unrolled VPU FMA (outer-product accumulate) rather
        # than pushing a >95%-padded matmul through the MXU.
        y = w[:, 0:1] * x[0:1, :]
        for ci in range(1, cin):
            y = y + w[:, ci:ci + 1] * x[ci:ci + 1, :]
    else:
        y = jnp.dot(w, x, preferred_element_type=jnp.float32)

    # Folded BatchNorm shift (scale already in the weights) + ReLU6.
    y = jnp.clip(y + shift_ref[...], 0.0, 6.0).astype(o_ref.dtype)

    # Nearest-neighbour 2x: out[2h+dh, 2w+dw] = y[h, w].  Store the same
    # lane-dense slab four times; no in-kernel relayout / interleave.
    o_ref[0, 0, 0, :, :] = y
    o_ref[0, 0, 1, :, :] = y
    o_ref[0, 1, 0, :, :] = y
    o_ref[0, 1, 1, :, :] = y


def _pick_row_tile(H, W, Cin, Cout, dtype_bytes=4,
                   block_budget_bytes=32 * 1024 * 1024):
    """Largest row-tile TH (divisor of H) whose double-buffered in+out blocks
    fit the budget and whose flattened lane width TH*W stays 128-aligned.
    Conservative enough for v7x's 64 MiB VMEM; v5e/v6e have more headroom."""
    per_row = 2 * W * (Cin + 4 * Cout) * dtype_bytes   # x2: double buffering
    max_rows = max(1, block_budget_bytes // per_row)
    for cand in range(H, 0, -1):
        if H % cand != 0:
            continue
        fits = cand <= max_rows
        aligned = (cand == H) or ((cand * W) % 128 == 0)
        if fits and aligned:
            return cand
    return H  # fallback: full image (block == full array extent is always legal)


def upsample_forward(x_nchw, weight, gamma, beta, running_mean, running_var,
                     eps=1e-5, block_rows=None):
    """Conv1x1(bias=False) + BatchNorm2d (inference) + ReLU6 + 2x nearest upsample.

    x_nchw: (N, Cin, H, W) float32.  Returns (N, Cout, 2H, 2W) float32.
    """
    N, Cin, H, W = x_nchw.shape
    Cout = weight.shape[0]

    # Fold BN (inference, running stats) into the conv: no conv bias and the
    # affine precedes ReLU6, so scale goes into the weights, shift stays as a
    # post-matmul add.
    scale = gamma / jnp.sqrt(running_var + eps)                      # (Cout,)
    shift = beta - running_mean * scale                              # (Cout,)
    w_mat = (weight.reshape(Cout, Cin) * scale[:, None]).astype(jnp.float32)
    shift_col = shift.reshape(Cout, 1).astype(jnp.float32)
    # TODO(synk): for production channel counts (>=64) cast x/w_mat to bfloat16
    # (keeping f32 accumulation) to halve HBM traffic on v6e/v7x.

    if block_rows is None:
        block_rows = _pick_row_tile(H, W, Cin, Cout)
    assert H % block_rows == 0
    assert block_rows == H or (block_rows * W) % 128 == 0

    S = block_rows * W
    n_row_tiles = H // block_rows

    # Free reshape: NCHW is row-major, so (N,Cin,H,W)->(N,Cin,H*W) moves no data.
    x_flat = x_nchw.reshape(N, Cin, H * W).astype(jnp.float32)

    out5 = pl.pallas_call(
        _upsample_kernel,
        out_shape=jax.ShapeDtypeStruct((N, 2, 2, Cout, H * W), jnp.float32),
        grid_spec=pltpu.PrefetchScalarGridSpec(
            num_scalar_prefetch=0,
            grid=(N, n_row_tiles),
            in_specs=[
                pl.BlockSpec((1, Cin, S), lambda n, h: (n, 0, h)),
                pl.BlockSpec((Cout, Cin), lambda n, h: (0, 0)),
                pl.BlockSpec((Cout, 1), lambda n, h: (0, 0)),
            ],
            out_specs=pl.BlockSpec((1, 2, 2, Cout, S),
                                   lambda n, h: (n, 0, 0, 0, h)),
        ),
        compiler_params=pltpu.CompilerParams(
            dimension_semantics=("parallel", "parallel"),
            vmem_limit_bytes=48 * 1024 * 1024,
        ),
    )(x_flat, w_mat, shift_col)

    # Fold the 2x nearest interleave into the single layout-change copy:
    # (N,2,2,Cout,H*W) -> (N,Cout,H,2,W,2) -> (N,Cout,2H,2W).  Both reshapes are
    # free; the transpose is the one XLA copy we'd pay anyway to go back to NCHW.
    out6 = out5.reshape(N, 2, 2, Cout, H, W)
    out6 = jnp.transpose(out6, (0, 3, 4, 1, 5, 2))
    return out6.reshape(N, Cout, 2 * H, 2 * W)


if __name__ == "__main__":
    key = jax.random.PRNGKey(0)
    k_x, k_w, k_g, k_b, k_m, k_v = jax.random.split(key, 6)

    N, Cin, Cout, H, W = 2, 4, 8, 16, 16

    x = jax.random.normal(k_x, (N, Cin, H, W), dtype=jnp.float32)
    weight = jax.random.normal(k_w, (Cout, Cin, 1, 1), dtype=jnp.float32) * 0.5
    gamma = 1.0 + 0.1 * jax.random.normal(k_g, (Cout,), dtype=jnp.float32)
    beta = 0.1 * jax.random.normal(k_b, (Cout,), dtype=jnp.float32)
    running_mean = 0.1 * jax.random.normal(k_m, (Cout,), dtype=jnp.float32)
    running_var = jnp.abs(jax.random.normal(k_v, (Cout,), dtype=jnp.float32)) + 0.5

    # block_rows=8 -> two row-tiles per image, exercising the spatial grid axis.
    out = upsample_forward(x, weight, gamma, beta, running_mean, running_var,
                           block_rows=8)
    out = jax.block_until_ready(out)

    # Reference in plain JAX (conv1x1 + folded BN + ReLU6 + nearest 2x).
    scale = gamma / jnp.sqrt(running_var + 1e-5)
    shift = beta - running_mean * scale
    ref = jnp.einsum("nchw,oc->nohw", x, weight.reshape(Cout, Cin))
    ref = ref * scale[None, :, None, None] + shift[None, :, None, None]
    ref = jnp.clip(ref, 0.0, 6.0)
    ref = jnp.repeat(jnp.repeat(ref, 2, axis=2), 2, axis=3)

    assert out.shape == (N, Cout, 2 * H, 2 * W)
    assert jnp.allclose(out, ref, atol=1e-4, rtol=1e-4)
    print("KERNEL_OK")
</pallas_src>

<mosaic_0001>
module attributes {stable_mosaic.version = 11 : i64} {
  func.func @_upsample_kernel(%arg0: i32, %arg1: i32, %arg2: memref<1x4x128xf32, #tpu.memory_space<vmem>>, %arg3: memref<8x4xf32, #tpu.memory_space<vmem>>, %arg4: memref<8x1xf32, #tpu.memory_space<vmem>>, %arg5: memref<1x2x2x8x128xf32, #tpu.memory_space<vmem>>) attributes {dimension_semantics = [#tpu.dimension_semantics<parallel>, #tpu.dimension_semantics<parallel>], iteration_bounds = array<i64: 2, 2>, scalar_prefetch = 0 : i64, scratch_operands = 0 : i64, tpu.core_type = #tpu.core_type<tc>, window_params = [{transform_indices = @transform_0, window_bounds = array<i64: 1, 4, 128>}, {pipeline_mode = #tpu.pipeline_mode<synchronous>, transform_indices = @transform_1, window_bounds = array<i64: 8, 4>}, {pipeline_mode = #tpu.pipeline_mode<synchronous>, transform_indices = @transform_2, window_bounds = array<i64: 8, 1>}, {transform_indices = @transform_3, window_bounds = array<i64: 1, 2, 2, 8, 128>}]} {
    %c0 = arith.constant 0 : index
    %c0_0 = arith.constant 0 : index
    %c0_1 = arith.constant 0 : index
    %0 = vector.load %arg2[%c0, %c0_0, %c0_1] : memref<1x4x128xf32, #tpu.memory_space<vmem>>, vector<1x4x128xf32>
    %1 = vector.shape_cast %0 : vector<1x4x128xf32> to vector<4x128xf32>
    %c0_2 = arith.constant 0 : index
    %c0_3 = arith.constant 0 : index
    %2 = vector.load %arg3[%c0_2, %c0_3] : memref<8x4xf32, #tpu.memory_space<vmem>>, vector<8x4xf32>
    %3 = vector.extract_strided_slice %2 {offsets = [0, 0], sizes = [8, 1], strides = [1, 1]} : vector<8x4xf32> to vector<8x1xf32>
    %4 = vector.extract_strided_slice %1 {offsets = [0, 0], sizes = [1, 128], strides = [1, 1]} : vector<4x128xf32> to vector<1x128xf32>
    %5 = vector.broadcast %3 : vector<8x1xf32> to vector<8x128xf32>
    %6 = vector.broadcast %4 : vector<1x128xf32> to vector<8x128xf32>
    %7 = arith.mulf %5, %6 : vector<8x128xf32>
    %8 = vector.extract_strided_slice %2 {offsets = [0, 1], sizes = [8, 1], strides = [1, 1]} : vector<8x4xf32> to vector<8x1xf32>
    %9 = vector.extract_strided_slice %1 {offsets = [1, 0], sizes = [1, 128], strides = [1, 1]} : vector<4x128xf32> to vector<1x128xf32>
    %10 = vector.broadcast %8 : vector<8x1xf32> to vector<8x128xf32>
    %11 = vector.broadcast %9 : vector<1x128xf32> to vector<8x128xf32>
    %12 = arith.mulf %10, %11 : vector<8x128xf32>
    %13 = arith.addf %7, %12 : vector<8x128xf32>
    %14 = vector.extract_strided_slice %2 {offsets = [0, 2], sizes = [8, 1], strides = [1, 1]} : vector<8x4xf32> to vector<8x1xf32>
    %15 = vector.extract_strided_slice %1 {offsets = [2, 0], sizes = [1, 128], strides = [1, 1]} : vector<4x128xf32> to vector<1x128xf32>
    %16 = vector.broadcast %14 : vector<8x1xf32> to vector<8x128xf32>
    %17 = vector.broadcast %15 : vector<1x128xf32> to vector<8x128xf32>
    %18 = arith.mulf %16, %17 : vector<8x128xf32>
    %19 = arith.addf %13, %18 : vector<8x128xf32>
    %20 = vector.extract_strided_slice %2 {offsets = [0, 3], sizes = [8, 1], strides = [1, 1]} : vector<8x4xf32> to vector<8x1xf32>
    %21 = vector.extract_strided_slice %1 {offsets = [3, 0], sizes = [1, 128], strides = [1, 1]} : vector<4x128xf32> to vector<1x128xf32>
    %22 = vector.broadcast %20 : vector<8x1xf32> to vector<8x128xf32>
    %23 = vector.broadcast %21 : vector<1x128xf32> to vector<8x128xf32>
    %24 = arith.mulf %22, %23 : vector<8x128xf32>
    %25 = arith.addf %19, %24 : vector<8x128xf32>
    %c0_4 = arith.constant 0 : index
    %c0_5 = arith.constant 0 : index
    %26 = vector.load %arg4[%c0_4, %c0_5] : memref<8x1xf32, #tpu.memory_space<vmem>>, vector<8x1xf32>
    %27 = vector.broadcast %26 : vector<8x1xf32> to vector<8x128xf32>
    %28 = arith.addf %25, %27 : vector<8x128xf32>
    %cst = arith.constant 0.000000e+00 : f32
    %cst_6 = arith.constant 6.000000e+00 : f32
    %29 = vector.broadcast %cst : f32 to vector<8x128xf32>
    %30 = arith.maximumf %29, %28 : vector<8x128xf32>
    %31 = vector.broadcast %cst_6 : f32 to vector<8x128xf32>
    %32 = arith.minimumf %31, %30 : vector<8x128xf32>
    %c0_7 = arith.constant 0 : index
    %c0_8 = arith.constant 0 : index
    %c0_9 = arith.constant 0 : index
    %c0_10 = arith.constant 0 : index
    %c0_11 = arith.constant 0 : index
    %33 = vector.load %arg5[%c0_7, %c0_8, %c0_9, %c0_10, %c0_11] : memref<1x2x2x8x128xf32, #tpu.memory_space<vmem>>, vector<1x1x1x8x128xf32>
    %34 = vector.shape_cast %33 : vector<1x1x1x8x128xf32> to vector<8x128xf32>
    %35 = vector.shape_cast %32 : vector<8x128xf32> to vector<1x1x1x8x128xf32>
    tpu.vector_store %arg5[%c0_7, %c0_8, %c0_9, %c0_10, %c0_11], %35 {strides = array<i32>} : memref<1x2x2x8x128xf32, #tpu.memory_space<vmem>>, vector<1x1x1x8x128xf32>,
    %c0_12 = arith.constant 0 : index
    %c0_13 = arith.constant 0 : index
    %c1 = arith.constant 1 : index
    %c0_14 = arith.constant 0 : index
    %c0_15 = arith.constant 0 : index
    %36 = vector.load %arg5[%c0_12, %c0_13, %c1, %c0_14, %c0_15] : memref<1x2x2x8x128xf32, #tpu.memory_space<vmem>>, vector<1x1x1x8x128xf32>
    %37 = vector.shape_cast %36 : vector<1x1x1x8x128xf32> to vector<8x128xf32>
    %38 = vector.shape_cast %32 : vector<8x128xf32> to vector<1x1x1x8x128xf32>
    tpu.vector_store %arg5[%c0_12, %c0_13, %c1, %c0_14, %c0_15], %38 {strides = array<i32>} : memref<1x2x2x8x128xf32, #tpu.memory_space<vmem>>, vector<1x1x1x8x128xf32>,
    %c0_16 = arith.constant 0 : index
    %c1_17 = arith.constant 1 : index
    %c0_18 = arith.constant 0 : index
    %c0_19 = arith.constant 0 : index
    %c0_20 = arith.constant 0 : index
    %39 = vector.load %arg5[%c0_16, %c1_17, %c0_18, %c0_19, %c0_20] : memref<1x2x2x8x128xf32, #tpu.memory_space<vmem>>, vector<1x1x1x8x128xf32>
    %40 = vector.shape_cast %39 : vector<1x1x1x8x128xf32> to vector<8x128xf32>
    %41 = vector.shape_cast %32 : vector<8x128xf32> to vector<1x1x1x8x128xf32>
    tpu.vector_store %arg5[%c0_16, %c1_17, %c0_18, %c0_19, %c0_20], %41 {strides = array<i32>} : memref<1x2x2x8x128xf32, #tpu.memory_space<vmem>>, vector<1x1x1x8x128xf32>,
    %c0_21 = arith.constant 0 : index
    %c1_22 = arith.constant 1 : index
    %c1_23 = arith.constant 1 : index
    %c0_24 = arith.constant 0 : index
    %c0_25 = arith.constant 0 : index
    %42 = vector.load %arg5[%c0_21, %c1_22, %c1_23, %c0_24, %c0_25] : memref<1x2x2x8x128xf32, #tpu.memory_space<vmem>>, vector<1x1x1x8x128xf32>
    %43 = vector.shape_cast %42 : vector<1x1x1x8x128xf32> to vector<8x128xf32>
    %44 = vector.shape_cast %32 : vector<8x128xf32> to vector<1x1x1x8x128xf32>
    tpu.vector_store %arg5[%c0_21, %c1_22, %c1_23, %c0_24, %c0_25], %44 {strides = array<i32>} : memref<1x2x2x8x128xf32, #tpu.memory_space<vmem>>, vector<1x1x1x8x128xf32>,
    return
  }
  func.func @transform_0(%arg0: i32, %arg1: i32) -> (i32, i32, i32) {
    %c0_i32 = arith.constant 0 : i32
    %c0_i32_0 = arith.constant 0 : i32
    return %arg0, %c0_i32, %arg1 : i32, i32, i32
  }
  func.func @transform_1(%arg0: i32, %arg1: i32) -> (i32, i32) {
    %c0_i32 = arith.constant 0 : i32
    %c0_i32_0 = arith.constant 0 : i32
    %c0_i32_1 = arith.constant 0 : i32
    return %c0_i32, %c0_i32_0 : i32, i32
  }
  func.func @transform_2(%arg0: i32, %arg1: i32) -> (i32, i32) {
    %c0_i32 = arith.constant 0 : i32
    %c0_i32_0 = arith.constant 0 : i32
    %c0_i32_1 = arith.constant 0 : i32
    return %c0_i32, %c0_i32_0 : i32, i32
  }
  func.func @transform_3(%arg0: i32, %arg1: i32) -> (i32, i32, i32, i32, i32) {
    %c0_i32 = arith.constant 0 : i32
    %c0_i32_0 = arith.constant 0 : i32
    %c0_i32_1 = arith.constant 0 : i32
    %c0_i32_2 = arith.constant 0 : i32
    return %arg0, %c0_i32, %c0_i32_0, %c0_i32_1, %arg1 : i32, i32, i32, i32, i32
  }
}

</mosaic_0001>

<llo_original>
// kernel: tpu_custom_call.1
$region0: #{tpu_custom_call.1}
  #allocation0 [shape = 'u32[]', space=smem, size = 0x4, offset = 0x4, fixed_abs, tag = 'smem constant byte address 0x4 - core index']
  #allocation1 [shape = 'u32[144,128]{1,0:T(1,128)}', space=vmem, size = 0x12000, scoped, tag = 'internal scratch']
  %s0 = inlined_call_operand.vmem [shape: f32[2,4,256], index: 0, kind: input, shape index: {}]
  %s1 = inlined_call_operand.vmem [shape: f32[8,4], index: 1, kind: input, shape index: {}]
  %s2 = inlined_call_operand.vmem [shape: f32[8,1], index: 2, kind: input, shape index: {}]
  %s3 = inlined_call_operand.hbm [shape: f32[2,2,2,8,256], index: 3, kind: output, shape index: {}]
  %s4 = sld [smem:[#allocation0]]
  $region45: #{tpu_custom_call.1} parent=0
    _
  %s6 = ssub.s32 1, %s4
  %s7 = scalar_select 0, %s6, %s4
  $region1: #{tpu_custom_call.1} parent=0
    #allocation2 [shape = 'u8[32768]{0}', space=vmem, size = 0x8000, scoped, tag = 'output window, operand 0']
    #allocation3 [shape = 's32[2]{0}', space=sflag, size = 0x8, scoped, tag = 'scoped memory for tpu_custom_call.1']
    %8 = vsyncpa [#allocation3], 0
    %s9 = scalar_lea.sflag [#allocation3], 1
    %10 = vsyncpa %s9, 0
    loop: start=0, step=1, limit=6
    $region2: #{tpu_custom_call.1} parent=1 // loop_pre_header
      _
    $region3: #{tpu_custom_call.1} parent=1 // loop_header
      %s12 = sphi 0, %s16
      %p13 = scmp.ge.s32.totalorder %s12, 6
      %s19 = sphi 0, %s31
      %s20 = sphi 0, %s27
      %s21 = sphi 0, %s19
      %s22 = sphi 0, %s20
      %s23 = sphi 0, %s21
      %s24 = sphi 0, %s22
      %s36 = sphi 0, %s38
      %s39 = sphi 0, %s36
      %s40 = sphi 0, %s39
      %s56 = sphi 0, %s40
      %s60 = sphi 0, %s60
      %s62 = sphi 0, %s60
      %s63 = sphi 0, %s62
      %s77 = sphi 0, %s63
      %s81 = sphi 0, %s81
      %s83 = sphi 0, %s81
      %s84 = sphi 0, %s83
      %s98 = sphi 0, %s84
      %s106 = sphi 0, %s108
      %s109 = sphi 0, %s106
      %s110 = sphi 0, %s109
      %s126 = sphi 0, %s110
    $region4: #{tpu_custom_call.1} parent=1 // loop_header_branch
      %15 = sbr.rel (%p13) target = $region8
    $region5: #{tpu_custom_call.1} parent=1 // loop_body
      %s17 = ssub.s32 %s12, 1
      %s18 = ssub.s32 %s12, 2
      %s25 = sadd.s32 1, %s20
      %p26 = scmp.ge.s32.totalorder %s25, 2
      %s27 = scalar_select %p26, 0, %s25
      %s28 = sadd.s32 1, %s19
      %s29 = scalar_select %p26, %s28, %s19
      %p30 = scmp.ge.s32.totalorder %s29, 2
      %s31 = scalar_select %p30, 0, %s29
      %s32 = ssub.s32 %s19, %s31
      %s33 = ssub.s32 %s20, %s27
      %s34 = sor.u32 %s32, %s33
      %p35 = scmp.eq.s32.totalorder %s34, 0
      %s37 = sadd.s32 %s36, 1
      %s38 = scalar_select %p35, %s36, %s37
      %p41 = pneg %p35
      %p42 = scmp.eq.s32.totalorder %s12, 3
      %p43 = por %p41, %p42
      %p44 = scmp.ne.s32.totalorder %s36, %s39
      %p45 = scmp.eq.s32.totalorder %s12, 0
      %p46 = por %p44, %p45
      %p47 = scmp.ne.s32.totalorder %s36, %s39
      %p48 = scmp.eq.s32.totalorder %s17, 3
      %p49 = por %p47, %p48
      %p50 = scmp.ne.s32.totalorder %s39, %s40
      %p51 = scmp.eq.s32.totalorder %s17, 0
      %p52 = por %p50, %p51
      %p53 = scmp.ne.s32.totalorder %s39, %s40
      %p54 = scmp.eq.s32.totalorder %s18, 3
      %p55 = por %p53, %p54
      %p57 = scmp.ne.s32.totalorder %s40, %s56
      %p58 = scmp.eq.s32.totalorder %s18, 0
      %p59 = por %p57, %p58
      %s61 = sadd.s32 %s60, 1
      %p64 = scmp.eq.s32.totalorder %s12, 3
      %p65 = scmp.ne.s32.totalorder %s60, %s62
      %p66 = scmp.eq.s32.totalorder %s12, 0
      %p67 = por %p65, %p66
      %p68 = scmp.ne.s32.totalorder %s60, %s62
      %p69 = scmp.eq.s32.totalorder %s17, 3
      %p70 = por %p68, %p69
      %p71 = scmp.ne.s32.totalorder %s62, %s63
      %p72 = scmp.eq.s32.totalorder %s17, 0
      %p73 = por %p71, %p72
      %p74 = scmp.ne.s32.totalorder %s62, %s63
      %p75 = scmp.eq.s32.totalorder %s18, 3
      %p76 = por %p74, %p75
      %p78 = scmp.ne.s32.totalorder %s63, %s77
      %p79 = scmp.eq.s32.totalorder %s18, 0
      %p80 = por %p78, %p79
      %s82 = sadd.s32 %s81, 1
      %p85 = scmp.eq.s32.totalorder %s12, 3
      %p86 = scmp.ne.s32.totalorder %s81, %s83
      %p87 = scmp.eq.s32.totalorder %s12, 0
      %p88 = por %p86, %p87
      %p89 = scmp.ne.s32.totalorder %s81, %s83
      %p90 = scmp.eq.s32.totalorder %s17, 3
      %p91 = por %p89, %p90
      %p92 = scmp.ne.s32.totalorder %s83, %s84
      %p93 = scmp.eq.s32.totalorder %s17, 0
      %p94 = por %p92, %p93
      %p95 = scmp.ne.s32.totalorder %s83, %s84
      %p96 = scmp.eq.s32.totalorder %s18, 3
      %p97 = por %p95, %p96
      %p99 = scmp.ne.s32.totalorder %s84, %s98
      %p100 = scmp.eq.s32.totalorder %s18, 0
      %p101 = por %p99, %p100
      %s102 = ssub.s32 %s19, %s31
      %s103 = ssub.s32 %s20, %s27
      %s104 = sor.u32 %s102, %s103
      %p105 = scmp.eq.s32.totalorder %s104, 0
      %s107 = sadd.s32 %s106, 1
      %s108 = scalar_select %p105, %s106, %s107
      %p111 = pneg %p105
      %p112 = scmp.eq.s32.totalorder %s12, 3
      %p113 = por %p111, %p112
      %p114 = scmp.ne.s32.totalorder %s106, %s109
      %p115 = scmp.eq.s32.totalorder %s12, 0
      %p116 = por %p114, %p115
      %p117 = scmp.ne.s32.totalorder %s106, %s109
      %p118 = scmp.eq.s32.totalorder %s17, 3
      %p119 = por %p117, %p118
      %p120 = scmp.ne.s32.totalorder %s109, %s110
      %p121 = scmp.eq.s32.totalorder %s17, 0
      %p122 = por %p120, %p121
      %p123 = scmp.ne.s32.totalorder %s109, %s110
      %p124 = scmp.eq.s32.totalorder %s18, 3
      %p125 = por %p123, %p124
      %p127 = scmp.ne.s32.totalorder %s110, %s126
      %p128 = scmp.eq.s32.totalorder %s18, 0
      %p129 = por %p127, %p128
      %p130 = scmp.le.s32.totalorder 1, %s12
      %p131 = scmp.lt.s32.totalorder %s12, 5
      %p132 = pnand %p130, %p131
      %p133 = pneg %p132
      // Predicated region
      $region9: #{tpu_custom_call.1} parent=5 // pred_check
        _
      $region10: #{tpu_custom_call.1} parent=5 // pred_check_branch
        %135 = sbr.rel (%p132) target = $region12
      $region11: #{tpu_custom_call.1} parent=5 // pred_region
        %s136 = ssub.s32 %s12, 1
        // Predicated region
        $region13: #{tpu_custom_call.1} parent=11 // pred_check
          %p137 = pneg %p73
        $region14: #{tpu_custom_call.1} parent=11 // pred_check_branch
          %139 = sbr.rel (%p137) target = $region16
        $region15: #{tpu_custom_call.1} parent=11 // pred_region
          _
        $region16: #{tpu_custom_call.1} parent=11 // pred_fallthru
          _
        // Predicated region
        $region17: #{tpu_custom_call.1} parent=11 // pred_check
          %p140 = pneg %p94
        $region18: #{tpu_custom_call.1} parent=11 // pred_check_branch
          %142 = sbr.rel (%p140) target = $region20
        $region19: #{tpu_custom_call.1} parent=11 // pred_region
          _
        $region20: #{tpu_custom_call.1} parent=11 // pred_fallthru
          _
      $region12: #{tpu_custom_call.1} parent=5 // pred_fallthru
        _
      %p143 = scmp.lt.s32.totalorder %s12, 4
      // Predicated region
      $region21: #{tpu_custom_call.1} parent=5 // pred_check
        %p144 = pneg %p143
      $region22: #{tpu_custom_call.1} parent=5 // pred_check_branch
        %146 = sbr.rel (%p144) target = $region24
      $region23: #{tpu_custom_call.1} parent=5 // pred_region
        // Predicated region
        $region25: #{tpu_custom_call.1} parent=23 // pred_check
          %p147 = pneg %p46
        $region26: #{tpu_custom_call.1} parent=23 // pred_check_branch
          %149 = sbr.rel (%p147) target = $region28
        $region27: #{tpu_custom_call.1} parent=23 // pred_region
          %p150 = scmp.lt.s32.totalorder %s19, 1
          %s151 = scalar_select %p150, %s19, 1
          %p152 = scmp.lt.s32.totalorder %s20, 1
          %s153 = scalar_select %p152, %s20, 1
          %s154 = smul.addr %s151, 2
          %s155 = sadd.s32 %s153, %s154
          %s156 = smul.addr %s155, 4
          %s157 = scalar_lea.vmem %s0, %s156
        $region28: #{tpu_custom_call.1} parent=23 // pred_fallthru
          _
      $region24: #{tpu_custom_call.1} parent=5 // pred_fallthru
        _
      %p158 = scmp.le.s32.totalorder 1, %s12
      %p159 = scmp.lt.s32.totalorder %s12, 5
      %p160 = pnand %p158, %p159
      %p161 = pneg %p160
      // Predicated region
      $region29: #{tpu_custom_call.1} parent=5 // pred_check
        _
      $region30: #{tpu_custom_call.1} parent=5 // pred_check_branch
        %163 = sbr.rel (%p160) target = $region32
      $region31: #{tpu_custom_call.1} parent=5 // pred_region
        %s164 = ssub.s32 %s12, 1
        %p165 = scmp.lt.s32.totalorder %s21, 1
        %s166 = scalar_select %p165, %s21, 1
        %p167 = scmp.lt.s32.totalorder %s22, 1
        %s168 = scalar_select %p167, %s22, 1
        %s169 = smul.addr %s166, 2
        %s170 = sadd.s32 %s168, %s169
        %s171 = smul.addr %s170, 4
        %s172 = scalar_lea.vmem %s0, %s171
        %p173 = pneg %p52
        %p174 = pneg %p49
        %p175 = pneg %p73
        %p176 = pneg %p70
        %p177 = pneg %p94
        %p178 = pneg %p91
        %p179 = pneg %p122
        %p180 = pneg %p119
        %s181 = sand.u32 %s109, 1
        %s182 = scalar_lea.sflag [#allocation3], %s181
        %s183 = sand.u32 %s109, 1
        %s184 = smul.addr %s183, 32
        %s185 = scalar_lea.vmem [#allocation2], %s184
        %p186 = scmp.lt.s32.totalorder %s21, 1
        %s187 = scalar_select %p186, %s21, 1
        %p188 = scmp.lt.s32.totalorder %s22, 1
        %s189 = scalar_select %p188, %s22, 1
        %s190 = smul.addr %s187, 2
        %s191 = sadd.s32 %s189, %s190
        %s192 = smul.addr %s191, 4
        %s193 = scalar_lea.vmem %s0, %s192
        %v194 = vld [vmem:[%s193] sm:$0xf]
        %v195 = vld [vmem:[%s1] sm:$0xff]
        %197 = vset.pattern.permute.xlu0 0
        %198 = vperm.xlu0 %197, %v195
        %v199 = vpop.permute.xlu0 %198
        %v201 = vlaneseq
        %v202 = vshrl.u32 %v201, 7
        %v203 = vsub.s32 0, %v202
        %v204 = vrot.slane %v194, %v203
        %v205 = vmul.f32 %v199, %v204
        %206 = vset.pattern.permute.xlu0 1
        %207 = vperm.xlu0 %206, %v195
        %v208 = vpop.permute.xlu0 %207
        %v210 = vlaneseq
        %v211 = vshrl.u32 %v210, 7
        %v212 = vsub.s32 1, %v211
        %v213 = vrot.slane %v194, %v212
        %v214 = vmul.f32 %v208, %v213
        %v215 = vadd.f32 %v205, %v214
        %216 = vset.pattern.permute.xlu0 2
        %217 = vperm.xlu0 %216, %v195
        %v218 = vpop.permute.xlu0 %217
        %v220 = vlaneseq
        %v221 = vshrl.u32 %v220, 7
        %v222 = vsub.s32 2, %v221
        %v223 = vrot.slane %v194, %v222
        %v224 = vmul.f32 %v218, %v223
        %v225 = vadd.f32 %v215, %v224
        %226 = vset.pattern.permute.xlu0 3
        %227 = vperm.xlu0 %226, %v195
        %v228 = vpop.permute.xlu0 %227
        %v230 = vlaneseq
        %v231 = vshrl.u32 %v230, 7
        %v232 = vsub.s32 3, %v231
        %v233 = vrot.slane %v194, %v232
        %v234 = vmul.f32 %v228, %v233
        %v235 = vadd.f32 %v225, %v234
        %v236 = vld [vmem:[%s2] sm:$0xff]
        %238 = vset.pattern.permute.xlu0 0
        %239 = vperm.xlu0 %238, %v236
        %v240 = vpop.permute.xlu0 %239
        %v242 = vadd.f32 %v235, %v240
        %v243 = vmax.f32 %v242, 0.0
        %v244 = vmin.f32 %v243, 6.0
        %245 = vst [vmem:[%s185] sm:$0xff] %v244
        %s246 = scalar_lea.vmem %s185, 8 [#allocation2]
        %247 = vst [vmem:[%s246] sm:$0xff] %v244
        %s248 = scalar_lea.vmem %s185, 16 [#allocation2]
        %249 = vst [vmem:[%s248] sm:$0xff] %v244
        %s250 = scalar_lea.vmem %s185, 24 [#allocation2]
        %251 = vst [vmem:[%s250] sm:$0xff] %v244
        %s252 = sand.u32 %s109, 1
        %s253 = scalar_lea.sflag [#allocation3], %s252
        %s254 = sand.u32 %s109, 1
        %s255 = smul.addr %s254, 32
        %s256 = scalar_lea.vmem [#allocation2], %s255
        // Predicated region
        $region33: #{tpu_custom_call.1} parent=31 // pred_check
          %p257 = pneg %p119
        $region34: #{tpu_custom_call.1} parent=31 // pred_check_branch
          %259 = sbr.rel (%p257) target = $region36
        $region35: #{tpu_custom_call.1} parent=31 // pred_region
          %s261 = ssub.s32 512, 512
          %262 = vsyncadd %s253, %s261
          %s263 = smul.addr %s21, 8
          %s264 = sadd.s32 %s22, %s263
          %s265 = smul.addr %s264, 128
          %s266 = scalar_lea.hbm %s3, %s265
          %s267 = sshll.u32 %s256, 4
          %s268 = int_to_ptr.vmem [resolvable:$true] %s267
          %273 = dma.vmem_to_hbm [thread:$0]  %s268, 512, %s266, %s253, 128, 256, 8
        $region36: #{tpu_custom_call.1} parent=31 // pred_fallthru
          _
      $region32: #{tpu_custom_call.1} parent=5 // pred_fallthru
        _
      %p274 = scmp.le.s32.totalorder 2, %s12
      // Predicated region
      $region37: #{tpu_custom_call.1} parent=5 // pred_check
        %p275 = pneg %p274
      $region38: #{tpu_custom_call.1} parent=5 // pred_check_branch
        %277 = sbr.rel (%p275) target = $region40
      $region39: #{tpu_custom_call.1} parent=5 // pred_region
        %s278 = ssub.s32 %s12, 2
        // Predicated region
        $region41: #{tpu_custom_call.1} parent=39 // pred_check
          %p279 = pneg %p125
        $region42: #{tpu_custom_call.1} parent=39 // pred_check_branch
          %281 = sbr.rel (%p279) target = $region44
        $region43: #{tpu_custom_call.1} parent=39 // pred_region
          %s282 = sand.u32 %s110, 1
          %s283 = scalar_lea.sflag [#allocation3], %s282
          %s284 = sand.u32 %s110, 1
          %s285 = smul.addr %s284, 32
          %s286 = scalar_lea.vmem [#allocation2], %s285
          %287 = dma.done %s283, 512
        $region44: #{tpu_custom_call.1} parent=39 // pred_fallthru
          _
      $region40: #{tpu_custom_call.1} parent=5 // pred_fallthru
        _
    $region6: #{tpu_custom_call.1} parent=1 // loop_footer
      %s16 = sadd.s32 1, %s12
    $region7: #{tpu_custom_call.1} parent=1 // loop_footer_branch
      %11 = sbr.rel target = $region3
    $region8: #{tpu_custom_call.1} parent=1 // loop_exit
      _
    %288 = vsyncpa [#allocation3], 1
    %s289 = scalar_lea.sflag [#allocation3], 1
    %290 = vsyncpa %s289, 1

</llo_original>
